<compile_context>
chip_gen: v7x
topology: tpu7x:2x2x1
jax: 0.10.0
libtpu: 0.0.40
codegen_flags: <defaults>
</compile_context>

<pallas_src>
import functools
import math

import jax
import jax.numpy as jnp
from jax.experimental import pallas as pl
from jax.experimental.pallas import tpu as pltpu

_LANE = 128


def _round_up(n, m):
    return ((n + m - 1) // m) * m


def _apply_activation(y, activation):
    """Compile-time activation selection (mirrors eval('nn.{}()') in torch)."""
    if activation == "ReLU":
        return jnp.maximum(y, 0.0)
    if activation == "SELU":
        alpha = 1.6732632423543772
        scale = 1.0507009873554805
        return scale * jnp.where(y > 0.0, y, alpha * (jnp.exp(y) - 1.0))
    if activation == "Tanh":
        return jnp.tanh(y)
    if activation == "Sigmoid":
        return 1.0 / (1.0 + jnp.exp(-y))
    raise ValueError(f"unsupported activation: {activation}")


def _mlp_kernel(x_ref, *refs, out_padded_dims, out_dim, activation):
    """Fused [Linear(+folded BN) -> act] x L on one batch tile.

    refs = (w_0, ..., w_{L-1}, bias_pack_ref, o_ref).
    Weights are bf16; biases / accumulators / activations are f32.
    o_ref holds the TRANSPOSED (out_dim, tile_b) output slab.
    """
    num_layers = len(out_padded_dims)
    o_ref = refs[-1]
    biases = refs[-2][...]                               # (L, max_out_p) f32
    h = x_ref[...]                                       # (tile_b, D0) bf16
    for l in range(num_layers):
        w = refs[l][...]                                 # (in_p, out_p) bf16
        out_p = out_padded_dims[l]
        b = biases[l:l + 1, :out_p]                      # (1, out_p) f32
        y = jnp.dot(h.astype(jnp.bfloat16), w,
                    preferred_element_type=jnp.float32) + b
        h = _apply_activation(y, activation)             # (tile_b, out_p) f32
    # Lane-dense transposed store: (tile_b, out_p_L) -> (out_p_L, tile_b) via
    # XLU transpose (free slot), then keep only the real output rows.
    o_ref[...] = h.T[:out_dim, :].astype(o_ref.dtype)


class SurvivalNetPallas:
    """JAX/Pallas mirror of the PyTorch SurvivalNet module (inference)."""

    def __init__(self, config, key, eps=1e-5):
        # TODO(synk): training-mode Dropout and batch-statistic BatchNorm are
        # stochastic / state-mutating and are not reproduced; eval semantics used.
        self.drop = config["drop"]            # identity at inference time
        self.norm = config["norm"]
        self.dims = list(config["dims"])
        self.activation = config["activation"]
        self.eps = eps
        # Input feature dim stays at its real width (x shipped unpadded);
        # hidden/output dims are padded to 128 lanes.
        self.padded_dims = [self.dims[0]] + [_round_up(d, _LANE)
                                             for d in self.dims[1:]]

        num_layers = len(self.dims) - 1
        max_out_p = max(self.padded_dims[1:])
        self.weights = []                     # [(in_p, out_p) bf16, ...]
        bias_rows = []
        for i in range(num_layers):
            fan_in, fan_out = self.dims[i], self.dims[i + 1]
            key, kw, kb = jax.random.split(key, 3)
            # torch Linear default init: U(-1/sqrt(fan_in), +1/sqrt(fan_in))
            bound = 1.0 / math.sqrt(fan_in)
            w_t = jax.random.uniform(kw, (fan_in, fan_out), jnp.float32,
                                     -bound, bound)   # stored transposed (in, out)
            b = jax.random.uniform(kb, (fan_out,), jnp.float32, -bound, bound)

            if self.norm:
                # BatchNorm1d fresh-init running stats / affine params, folded
                # into the Linear weights (eval-mode BN == affine rescale).
                gamma = jnp.ones((fan_out,), jnp.float32)
                beta = jnp.zeros((fan_out,), jnp.float32)
                run_mean = jnp.zeros((fan_out,), jnp.float32)
                run_var = jnp.ones((fan_out,), jnp.float32)
                scale = gamma * jax.lax.rsqrt(run_var + self.eps)
                w_t = w_t * scale[None, :]
                b = (b - run_mean) * scale + beta

            in_p = self.padded_dims[i]
            out_p = self.padded_dims[i + 1]
            # INVARIANT: padded rows/cols of every weight are ZERO. Required so
            # padded activation columns (nonzero after Sigmoid/SELU) cannot
            # contaminate real outputs of the next layer.
            w_pad = jnp.zeros((in_p, out_p), jnp.float32)
            w_pad = w_pad.at[:fan_in, :fan_out].set(w_t)
            self.weights.append(w_pad.astype(jnp.bfloat16))
            bias_rows.append(
                jnp.zeros((max_out_p,), jnp.float32).at[:fan_out].set(b))
        self.bias_pack = jnp.stack(bias_rows)           # (L, max_out_p) f32

    def __call__(self, x):
        B, D0 = x.shape
        assert D0 == self.dims[0]
        out_dim = self.dims[-1]

        # Batch tile: multiple of 128 (the batch becomes the OUTPUT lane axis),
        # up to 1024 rows to amortize per-grid-step overhead. tile_b >= 128
        # also satisfies the bf16 sublane minimum for the x block.
        # NOTE (v7x): for very large B an even tile count load-balances the
        # "parallel" axis across the 2 TensorCores.
        tile_b = min(1024, _round_up(B, _LANE))
        b_pad = _round_up(B, tile_b)

        # Ship x at its real feature width in bf16 (no lane padding in HBM).
        x_p = jnp.zeros((b_pad, D0), jnp.bfloat16)
        x_p = x_p.at[:B].set(x.astype(jnp.bfloat16))

        kernel = functools.partial(
            _mlp_kernel,
            out_padded_dims=tuple(self.padded_dims[1:]),
            out_dim=out_dim,
            activation=self.activation)

        in_specs = [pl.BlockSpec((tile_b, D0), lambda i: (i, 0))]
        for w in self.weights:
            # Full-array weight block with a constant index map: DMA'd once,
            # kept resident across all batch tiles by the auto-pipeline.
            # TODO(synk): at large hidden dims, add pipeline_mode=pl.Buffered(1)
            # or K-tile the weights to halve resident VMEM (v7x: 64 MiB).
            in_specs.append(pl.BlockSpec(w.shape, lambda i: (0, 0)))
        in_specs.append(pl.BlockSpec(self.bias_pack.shape, lambda i: (0, 0)))

        out = pl.pallas_call(
            kernel,
            out_shape=jax.ShapeDtypeStruct((out_dim, b_pad), jnp.float32),
            grid=(b_pad // tile_b,),
            in_specs=in_specs,
            out_specs=pl.BlockSpec((out_dim, tile_b), lambda i: (0, i)),
            compiler_params=pltpu.CompilerParams(
                dimension_semantics=("parallel",)),
        )(x_p, *self.weights, self.bias_pack)

        # Transposed (out_dim, b_pad) slab -> (B, out_dim); strip batch padding.
        return out[:, :B].T


def _reference_forward(net, x):
    """Pure-JAX reference mirroring the kernel math (same folded bf16 weights)."""
    h = x.astype(jnp.bfloat16)
    for l, w in enumerate(net.weights):
        out_p = net.padded_dims[l + 1]
        b = net.bias_pack[l:l + 1, :out_p]
        y = jnp.dot(h.astype(jnp.bfloat16), w,
                    preferred_element_type=jnp.float32) + b
        h = _apply_activation(y, net.activation)
    return h[:, :net.dims[-1]]


if __name__ == "__main__":
    config = {
        "drop": 0.2,
        "norm": True,
        "dims": [16, 32, 32, 1],   # input features -> hidden -> hidden -> risk score
        "activation": "ReLU",
        "device": "tpu",
    }

    key = jax.random.PRNGKey(0)
    key_params, key_x = jax.random.split(key)

    net = SurvivalNetPallas(config, key_params)

    batch = 8
    x = jax.random.normal(key_x, (batch, config["dims"][0]), jnp.float32)

    out = jax.block_until_ready(net(x))
    ref = _reference_forward(net, x)

    assert out.shape == (batch, config["dims"][-1])
    assert jnp.allclose(out, ref, atol=1e-4, rtol=1e-4), (
        f"max abs diff = {float(jnp.max(jnp.abs(out - ref)))}")

    print("KERNEL_OK")
</pallas_src>

<mosaic_0001>
module attributes {stable_mosaic.version = 11 : i64} {
  func.func @_mlp_kernel(%arg0: i32, %arg1: memref<128x16xbf16, #tpu.memory_space<vmem>>, %arg2: memref<16x128xbf16, #tpu.memory_space<vmem>>, %arg3: memref<128x128xbf16, #tpu.memory_space<vmem>>, %arg4: memref<128x128xbf16, #tpu.memory_space<vmem>>, %arg5: memref<3x128xf32, #tpu.memory_space<vmem>>, %arg6: memref<1x128xf32, #tpu.memory_space<vmem>>) attributes {dimension_semantics = [#tpu.dimension_semantics<parallel>], iteration_bounds = array<i64: 1>, scalar_prefetch = 0 : i64, scratch_operands = 0 : i64, tpu.core_type = #tpu.core_type<tc>, window_params = [{transform_indices = @transform_0, window_bounds = array<i64: 128, 16>}, {pipeline_mode = #tpu.pipeline_mode<synchronous>, transform_indices = @transform_1, window_bounds = array<i64: 16, 128>}, {pipeline_mode = #tpu.pipeline_mode<synchronous>, transform_indices = @transform_2, window_bounds = array<i64: 128, 128>}, {pipeline_mode = #tpu.pipeline_mode<synchronous>, transform_indices = @transform_3, window_bounds = array<i64: 128, 128>}, {pipeline_mode = #tpu.pipeline_mode<synchronous>, transform_indices = @transform_4, window_bounds = array<i64: 3, 128>}, {transform_indices = @transform_5, window_bounds = array<i64: 1, 128>}]} {
    %c0 = arith.constant 0 : index
    %c0_0 = arith.constant 0 : index
    %0 = vector.load %arg5[%c0, %c0_0] : memref<3x128xf32, #tpu.memory_space<vmem>>, vector<3x128xf32>
    %c0_1 = arith.constant 0 : index
    %c0_2 = arith.constant 0 : index
    %1 = vector.load %arg1[%c0_1, %c0_2] : memref<128x16xbf16, #tpu.memory_space<vmem>>, vector<128x16xbf16>
    %c0_3 = arith.constant 0 : index
    %c0_4 = arith.constant 0 : index
    %2 = vector.load %arg2[%c0_3, %c0_4] : memref<16x128xbf16, #tpu.memory_space<vmem>>, vector<16x128xbf16>
    %3 = vector.extract_strided_slice %0 {offsets = [0, 0], sizes = [1, 128], strides = [1, 1]} : vector<3x128xf32> to vector<1x128xf32>
    %cst = arith.constant dense<0.000000e+00> : vector<128x128xf32>
    %4 = tpu.matmul %1, %2, %cst {dimension_numbers = #tpu.dot_dimension_numbers<[1], [0], [0], [1], [0, 0, 1, 1], [], []>} : vector<128x16xbf16>, vector<16x128xbf16>, vector<128x128xf32> -> vector<128x128xf32>
    %5 = vector.broadcast %3 : vector<1x128xf32> to vector<128x128xf32>
    %6 = arith.addf %4, %5 : vector<128x128xf32>
    %cst_5 = arith.constant 0.000000e+00 : f32
    %7 = vector.broadcast %cst_5 : f32 to vector<128x128xf32>
    %8 = arith.maximumf %6, %7 : vector<128x128xf32>
    %c0_6 = arith.constant 0 : index
    %c0_7 = arith.constant 0 : index
    %9 = vector.load %arg3[%c0_6, %c0_7] : memref<128x128xbf16, #tpu.memory_space<vmem>>, vector<128x128xbf16>
    %10 = vector.extract_strided_slice %0 {offsets = [1, 0], sizes = [1, 128], strides = [1, 1]} : vector<3x128xf32> to vector<1x128xf32>
    %11 = arith.truncf %8 : vector<128x128xf32> to vector<128x128xbf16>
    %cst_8 = arith.constant dense<0.000000e+00> : vector<128x128xf32>
    %12 = tpu.matmul %11, %9, %cst_8 {dimension_numbers = #tpu.dot_dimension_numbers<[1], [0], [0], [1], [0, 0, 1, 1], [], []>} : vector<128x128xbf16>, vector<128x128xbf16>, vector<128x128xf32> -> vector<128x128xf32>
    %13 = vector.broadcast %10 : vector<1x128xf32> to vector<128x128xf32>
    %14 = arith.addf %12, %13 : vector<128x128xf32>
    %cst_9 = arith.constant 0.000000e+00 : f32
    %15 = vector.broadcast %cst_9 : f32 to vector<128x128xf32>
    %16 = arith.maximumf %14, %15 : vector<128x128xf32>
    %c0_10 = arith.constant 0 : index
    %c0_11 = arith.constant 0 : index
    %17 = vector.load %arg4[%c0_10, %c0_11] : memref<128x128xbf16, #tpu.memory_space<vmem>>, vector<128x128xbf16>
    %18 = vector.extract_strided_slice %0 {offsets = [2, 0], sizes = [1, 128], strides = [1, 1]} : vector<3x128xf32> to vector<1x128xf32>
    %19 = arith.truncf %16 : vector<128x128xf32> to vector<128x128xbf16>
    %cst_12 = arith.constant dense<0.000000e+00> : vector<128x128xf32>
    %20 = tpu.matmul %19, %17, %cst_12 {dimension_numbers = #tpu.dot_dimension_numbers<[1], [0], [0], [1], [0, 0, 1, 1], [], []>} : vector<128x128xbf16>, vector<128x128xbf16>, vector<128x128xf32> -> vector<128x128xf32>
    %21 = vector.broadcast %18 : vector<1x128xf32> to vector<128x128xf32>
    %22 = arith.addf %20, %21 : vector<128x128xf32>
    %cst_13 = arith.constant 0.000000e+00 : f32
    %23 = vector.broadcast %cst_13 : f32 to vector<128x128xf32>
    %24 = arith.maximumf %22, %23 : vector<128x128xf32>
    %25 = tpu.transpose %24, [1, 0] : vector<128x128xf32> -> vector<128x128xf32>
    %26 = vector.extract_strided_slice %25 {offsets = [0, 0], sizes = [1, 128], strides = [1, 1]} : vector<128x128xf32> to vector<1x128xf32>
    %c0_14 = arith.constant 0 : index
    %c0_15 = arith.constant 0 : index
    %27 = vector.load %arg6[%c0_14, %c0_15] : memref<1x128xf32, #tpu.memory_space<vmem>>, vector<1x128xf32>
    tpu.vector_store %arg6[%c0_14, %c0_15], %26 {strides = array<i32>} : memref<1x128xf32, #tpu.memory_space<vmem>>, vector<1x128xf32>,
    return
  }
  func.func @transform_0(%arg0: i32) -> (i32, i32) {
    %c0_i32 = arith.constant 0 : i32
    %c0_i32_0 = arith.constant 0 : i32
    return %arg0, %c0_i32 : i32, i32
  }
  func.func @transform_1(%arg0: i32) -> (i32, i32) {
    %c0_i32 = arith.constant 0 : i32
    %c0_i32_0 = arith.constant 0 : i32
    %c0_i32_1 = arith.constant 0 : i32
    return %c0_i32, %c0_i32_0 : i32, i32
  }
  func.func @transform_2(%arg0: i32) -> (i32, i32) {
    %c0_i32 = arith.constant 0 : i32
    %c0_i32_0 = arith.constant 0 : i32
    %c0_i32_1 = arith.constant 0 : i32
    return %c0_i32, %c0_i32_0 : i32, i32
  }
  func.func @transform_3(%arg0: i32) -> (i32, i32) {
    %c0_i32 = arith.constant 0 : i32
    %c0_i32_0 = arith.constant 0 : i32
    %c0_i32_1 = arith.constant 0 : i32
    return %c0_i32, %c0_i32_0 : i32, i32
  }
  func.func @transform_4(%arg0: i32) -> (i32, i32) {
    %c0_i32 = arith.constant 0 : i32
    %c0_i32_0 = arith.constant 0 : i32
    %c0_i32_1 = arith.constant 0 : i32
    return %c0_i32, %c0_i32_0 : i32, i32
  }
  func.func @transform_5(%arg0: i32) -> (i32, i32) {
    %c0_i32 = arith.constant 0 : i32
    %c0_i32_0 = arith.constant 0 : i32
    return %c0_i32, %arg0 : i32, i32
  }
}

</mosaic_0001>

<llo_original>
// kernel: tpu_custom_call.1
$region0: #{tpu_custom_call.1}
  #allocation0 [shape = 'u32[]', space=smem, size = 0x4, offset = 0x4, fixed_abs, tag = 'smem constant byte address 0x4 - core index']
  #allocation1 [shape = 'u32[144,128]{1,0:T(1,128)}', space=vmem, size = 0x12000, scoped, tag = 'internal scratch']
  %s0 = inlined_call_operand.vmem [shape: bf16[128,16], index: 0, kind: input, shape index: {}]
  %s1 = inlined_call_operand.vmem [shape: bf16[16,128], index: 1, kind: input, shape index: {}]
  %s2 = inlined_call_operand.vmem [shape: bf16[128,128], index: 2, kind: input, shape index: {}]
  %s3 = inlined_call_operand.hbm [shape: bf16[128,128], index: 3, kind: input, shape index: {}]
  %s4 = inlined_call_operand.vmem [shape: f32[3,128], index: 4, kind: input, shape index: {}]
  %s5 = inlined_call_operand.hbm [shape: f32[1,128], index: 5, kind: output, shape index: {}]
  %s6 = sld [smem:[#allocation0]]
  $region34: #{tpu_custom_call.1} parent=0
    _
  %s8 = ssub.s32 1, %s6
  %s9 = scalar_select 0, %s8, %s6
  $region1: #{tpu_custom_call.1} parent=0
    #allocation2 [shape = 'u8[32768]{0}', space=vmem, size = 0x8000, scoped, tag = 'input window, operand 3, single buffered']
    #allocation3 [shape = 's32[1]{0}', space=sflag, size = 0x4, scoped, tag = 'scoped memory for tpu_custom_call.1']
    #allocation4 [shape = 's32[1]{0}', space=sflag, size = 0x4, scoped, tag = 'scoped memory for tpu_custom_call.1']
    #allocation5 [shape = 'u8[512]{0}', space=vmem, size = 0x400, scoped, tag = 'output window, operand 0, single buffered']
    %10 = vsyncpa [#allocation3], 0
    %11 = vsyncpa [#allocation4], 0
    // Predicated region
    $region2: #{tpu_custom_call.1} parent=1 // pred_check
      _
    $region3: #{tpu_custom_call.1} parent=1 // pred_check_branch
      %13 = sbr.rel (0) target = $region5
    $region4: #{tpu_custom_call.1} parent=1 // pred_region
      _
    $region5: #{tpu_custom_call.1} parent=1 // pred_fallthru
      _
    // Predicated region
    $region6: #{tpu_custom_call.1} parent=1 // pred_check
      _
    $region7: #{tpu_custom_call.1} parent=1 // pred_check_branch
      %15 = sbr.rel (0) target = $region9
    $region8: #{tpu_custom_call.1} parent=1 // pred_region
      _
    $region9: #{tpu_custom_call.1} parent=1 // pred_fallthru
      _
    // Predicated region
    $region10: #{tpu_custom_call.1} parent=1 // pred_check
      _
    $region11: #{tpu_custom_call.1} parent=1 // pred_check_branch
      %17 = sbr.rel (0) target = $region13
    $region12: #{tpu_custom_call.1} parent=1 // pred_region
      _
    $region13: #{tpu_custom_call.1} parent=1 // pred_fallthru
      _
    // Predicated region
    $region14: #{tpu_custom_call.1} parent=1 // pred_check
      _
    $region15: #{tpu_custom_call.1} parent=1 // pred_check_branch
      %19 = sbr.rel (0) target = $region17
    $region16: #{tpu_custom_call.1} parent=1 // pred_region
      %s21 = ssub.s32 1024, 1024
      %22 = vsyncadd [#allocation3], %s21
      %s23 = sshll.u32 [#allocation2], 4
      %s24 = int_to_ptr.vmem [resolvable:$true] %s23
      %29 = dma.hbm_to_vmem [thread:$0]  %s3, 1024, %s24, [#allocation3], 64, 64, 4
    $region17: #{tpu_custom_call.1} parent=1 // pred_fallthru
      _
    // Predicated region
    $region18: #{tpu_custom_call.1} parent=1 // pred_check
      _
    $region19: #{tpu_custom_call.1} parent=1 // pred_check_branch
      %31 = sbr.rel (0) target = $region21
    $region20: #{tpu_custom_call.1} parent=1 // pred_region
      _
    $region21: #{tpu_custom_call.1} parent=1 // pred_fallthru
      _
    // Predicated region
    $region22: #{tpu_custom_call.1} parent=1 // pred_check
      _
    $region23: #{tpu_custom_call.1} parent=1 // pred_check_branch
      %33 = sbr.rel (0) target = $region25
    $region24: #{tpu_custom_call.1} parent=1 // pred_region
      %34 = dma.done [#allocation3], 1024
    $region25: #{tpu_custom_call.1} parent=1 // pred_fallthru
      _
    %v36 = vld [vmem:[%s4] sm:$0x7]
    %v37 = vld [vmem:[%s0] sm:$0xf]
    %v38 = vld [vmem:[%s0 + $0x4] sm:$0xf]
    %v39 = vld [vmem:[%s0 + $0x8] sm:$0xf]
    %v40 = vld [vmem:[%s0 + $0xc] sm:$0xf]
    %v41 = vld [vmem:[%s0 + $0x10] sm:$0xf]
    %v42 = vld [vmem:[%s0 + $0x14] sm:$0xf]
    %v43 = vld [vmem:[%s0 + $0x18] sm:$0xf]
    %v44 = vld [vmem:[%s0 + $0x1c] sm:$0xf]
    %v45 = vld [vmem:[%s0 + $0x20] sm:$0xf]
    %v46 = vld [vmem:[%s0 + $0x24] sm:$0xf]
    %v47 = vld [vmem:[%s0 + $0x28] sm:$0xf]
    %v48 = vld [vmem:[%s0 + $0x2c] sm:$0xf]
    %v49 = vld [vmem:[%s0 + $0x30] sm:$0xf]
    %v50 = vld [vmem:[%s0 + $0x34] sm:$0xf]
    %v51 = vld [vmem:[%s0 + $0x38] sm:$0xf]
    %v52 = vld [vmem:[%s0 + $0x3c] sm:$0xf]
    %v53 = vld [vmem:[%s1] sm:$0xf]
    %v54 = vld [vmem:[%s1 + $0x4] sm:$0xf]
    %v55 = vlaneseq
    %v56 = vshrl.u32 %v55, 7
    %v57 = vsub.s32 0, %v56
    %v58 = vrot.slane %v36, %v57
    %v75 = vunpack.c.l.b16 %v37
    %v76 = vunpack.c.l.b16 %v38
    %v77 = vunpack.c.l.b16 %v39
    %v78 = vunpack.c.l.b16 %v40
    %v79 = vunpack.c.l.b16 %v41
    %v80 = vunpack.c.l.b16 %v42
    %v81 = vunpack.c.l.b16 %v43
    %v82 = vunpack.c.l.b16 %v44
    %v83 = vunpack.c.l.b16 %v45
    %v84 = vunpack.c.l.b16 %v46
    %v85 = vunpack.c.l.b16 %v47
    %v86 = vunpack.c.l.b16 %v48
    %v87 = vunpack.c.l.b16 %v49
    %v88 = vunpack.c.l.b16 %v50
    %v89 = vunpack.c.l.b16 %v51
    %v90 = vunpack.c.l.b16 %v52
    %v91 = vpack.c.b16 %v76, %v75
    %v92 = vpack.c.b16 %v78, %v77
    %v93 = vpack.c.b16 %v80, %v79
    %v94 = vpack.c.b16 %v82, %v81
    %v95 = vpack.c.b16 %v84, %v83
    %v96 = vpack.c.b16 %v86, %v85
    %v97 = vpack.c.b16 %v88, %v87
    %v98 = vpack.c.b16 %v90, %v89
    %v101 = vunpack.c.l.b16 %v53
    %v102 = vunpack.c.l.b16 %v54
    %v103 = vpack.c.b16 %v102, %v101
    %vm105 = vcmask 130048
    %v107 = vsel %vm105, %v91, 0
    %v110 = vsel %vm105, %v92, 0
    %v113 = vsel %vm105, %v93, 0
    %v116 = vsel %vm105, %v94, 0
    %v119 = vsel %vm105, %v95, 0
    %v122 = vsel %vm105, %v96, 0
    %v125 = vsel %vm105, %v97, 0
    %v128 = vsel %vm105, %v98, 0
    %130 = vmatprep.subr.bf16.mxu0 0
    %131 = vmatpush1.bf16.msra.mxu0 %v103
    %132 = vmatprep.subr.bf16.mxu0 0
    %133 = vmatpush1.bf16.msra.mxu0 0
    %134 = vmatprep.subr.bf16.mxu0 0
    %135 = vmatpush1.bf16.msra.mxu0 0
    %136 = vmatprep.subr.bf16.mxu0 0
    %137 = vmatpush1.bf16.msra.mxu0 0
    %138 = vmatprep.subr.bf16.mxu0 0
    %139 = vmatpush1.bf16.msra.mxu0 0
    %140 = vmatprep.subr.bf16.mxu0 0
    %141 = vmatpush1.bf16.msra.mxu0 0
    %142 = vmatprep.subr.bf16.mxu0 0
    %143 = vmatpush1.bf16.msra.mxu0 0
    %144 = vmatprep.subr.bf16.mxu0 0
    %145 = vmatpush1.bf16.msra.mxu0 0
    %146 = vmatprep.subr.bf16.mxu0 0
    %147 = vmatpush1.bf16.msra.mxu0 0
    %148 = vmatprep.subr.bf16.mxu0 0
    %149 = vmatpush1.bf16.msra.mxu0 0
    %150 = vmatprep.subr.bf16.mxu0 0
    %151 = vmatpush1.bf16.msra.mxu0 0
    %152 = vmatprep.subr.bf16.mxu0 0
    %153 = vmatpush1.bf16.msra.mxu0 0
    %154 = vmatprep.subr.bf16.mxu0 0
    %155 = vmatpush1.bf16.msra.mxu0 0
    %156 = vmatprep.subr.bf16.mxu0 0
    %157 = vmatpush1.bf16.msra.mxu0 0
    %158 = vmatprep.subr.bf16.mxu0 0
    %159 = vmatpush1.bf16.msra.mxu0 0
    %160 = vmatprep.subr.bf16.mxu0 0
    %161 = vmatpush1.bf16.msra.mxu0 0
    %162 = vmatprep.mubr.bf16.mxu0 0
    %163 = vmatmul.mubr.bf16.gmra.mrb[0].mxu0 %v107
    %v164 = vpop.f32.mrb[0].mxu0
    %v165 = vadd.f32 %v58, %v164
    %v166 = vpop.f32.mrb[0].mxu0
    %v167 = vpop.f32.mrb[0].mxu0
    %v168 = vadd.f32 %v58, %v167
    %v169 = vpop.f32.mrb[0].mxu0
    %170 = vmatprep.mubr.bf16.mxu0 0
    %171 = vmatmul.mubr.bf16.gmra.mrb[0].mxu0 %v110
    %v172 = vpop.f32.mrb[0].mxu0
    %v173 = vadd.f32 %v58, %v172
    %v174 = vpop.f32.mrb[0].mxu0
    %v175 = vpop.f32.mrb[0].mxu0
    %v176 = vadd.f32 %v58, %v175
    %v177 = vpop.f32.mrb[0].mxu0
    %178 = vmatprep.mubr.bf16.mxu0 0
    %179 = vmatmul.mubr.bf16.gmra.mrb[0].mxu0 %v113
    %v180 = vpop.f32.mrb[0].mxu0
    %v181 = vadd.f32 %v58, %v180
    %v182 = vpop.f32.mrb[0].mxu0
    %v183 = vpop.f32.mrb[0].mxu0
    %v184 = vadd.f32 %v58, %v183
    %v185 = vpop.f32.mrb[0].mxu0
    %186 = vmatprep.mubr.bf16.mxu0 0
    %187 = vmatmul.mubr.bf16.gmra.mrb[0].mxu0 %v116
    %v188 = vpop.f32.mrb[0].mxu0
    %v189 = vadd.f32 %v58, %v188
    %v190 = vpop.f32.mrb[0].mxu0
    %v191 = vpop.f32.mrb[0].mxu0
    %v192 = vadd.f32 %v58, %v191
    %v193 = vpop.f32.mrb[0].mxu0
    %194 = vmatprep.mubr.bf16.mxu0 0
    %195 = vmatmul.mubr.bf16.gmra.mrb[0].mxu0 %v119
    %v196 = vpop.f32.mrb[0].mxu0
    %v197 = vadd.f32 %v58, %v196
    %v198 = vpop.f32.mrb[0].mxu0
    %v199 = vpop.f32.mrb[0].mxu0
    %v200 = vadd.f32 %v58, %v199
    %v201 = vpop.f32.mrb[0].mxu0
    %202 = vmatprep.mubr.bf16.mxu0 0
    %203 = vmatmul.mubr.bf16.gmra.mrb[0].mxu0 %v122
    %v204 = vpop.f32.mrb[0].mxu0
    %v205 = vadd.f32 %v58, %v204
    %v206 = vpop.f32.mrb[0].mxu0
    %v207 = vpop.f32.mrb[0].mxu0
    %v208 = vadd.f32 %v58, %v207
    %v209 = vpop.f32.mrb[0].mxu0
    %210 = vmatprep.mubr.bf16.mxu0 0
    %211 = vmatmul.mubr.bf16.gmra.mrb[0].mxu0 %v125
    %v212 = vpop.f32.mrb[0].mxu0
    %v213 = vadd.f32 %v58, %v212
    %v214 = vpop.f32.mrb[0].mxu0
    %v215 = vpop.f32.mrb[0].mxu0
    %v216 = vadd.f32 %v58, %v215
    %v217 = vpop.f32.mrb[0].mxu0
    %218 = vmatprep.mubr.bf16.mxu0 0
    %219 = vmatmul.mubr.bf16.gmra.mrb[0].mxu0 %v128
    %v220 = vpop.f32.mrb[0].mxu0
    %v221 = vadd.f32 %v58, %v220
    %v222 = vpop.f32.mrb[0].mxu0
    %v223 = vpop.f32.mrb[0].mxu0
    %v224 = vadd.f32 %v58, %v223
    %v225 = vpop.f32.mrb[0].mxu0
    %226 = vdwg.mxu0
    %v227 = vmax.f32 %v165, 0.0
    %v228 = vmax.f32 %v168, 0.0
    %v229 = vmax.f32 %v173, 0.0
    %v230 = vmax.f32 %v176, 0.0
    %v231 = vmax.f32 %v181, 0.0
    %v232 = vmax.f32 %v184, 0.0
    %v233 = vmax.f32 %v189, 0.0
    %v234 = vmax.f32 %v192, 0.0
    %v235 = vmax.f32 %v197, 0.0
    %v236 = vmax.f32 %v200, 0.0
    %v237 = vmax.f32 %v205, 0.0
    %v238 = vmax.f32 %v208, 0.0
    %v239 = vmax.f32 %v213, 0.0
    %v240 = vmax.f32 %v216, 0.0
    %v241 = vmax.f32 %v221, 0.0
    %v242 = vmax.f32 %v224, 0.0
    %v243 = vld [vmem:[%s2] sm:$0xf]
    %v244 = vld [vmem:[%s2 + $0x4] sm:$0xf]
    %v245 = vld [vmem:[%s2 + $0x8] sm:$0xf]
    %v246 = vld [vmem:[%s2 + $0xc] sm:$0xf]
    %v247 = vld [vmem:[%s2 + $0x10] sm:$0xf]
    %v248 = vld [vmem:[%s2 + $0x14] sm:$0xf]
    %v249 = vld [vmem:[%s2 + $0x18] sm:$0xf]
    %v250 = vld [vmem:[%s2 + $0x1c] sm:$0xf]
    %v251 = vld [vmem:[%s2 + $0x20] sm:$0xf]
    %v252 = vld [vmem:[%s2 + $0x24] sm:$0xf]
    %v253 = vld [vmem:[%s2 + $0x28] sm:$0xf]
    %v254 = vld [vmem:[%s2 + $0x2c] sm:$0xf]
    %v255 = vld [vmem:[%s2 + $0x30] sm:$0xf]
    %v256 = vld [vmem:[%s2 + $0x34] sm:$0xf]
    %v257 = vld [vmem:[%s2 + $0x38] sm:$0xf]
    %v258 = vld [vmem:[%s2 + $0x3c] sm:$0xf]
    %v259 = vpack.c.bf16 %v228, %v227
    %v260 = vpack.c.bf16 %v230, %v229
    %v261 = vpack.c.bf16 %v232, %v231
    %v262 = vpack.c.bf16 %v234, %v233
    %v263 = vpack.c.bf16 %v236, %v235
    %v264 = vpack.c.bf16 %v238, %v237
    %v265 = vpack.c.bf16 %v240, %v239
    %v266 = vpack.c.bf16 %v242, %v241
    %v267 = vlaneseq
    %v268 = vshrl.u32 %v267, 7
    %v269 = vsub.s32 1, %v268
    %v270 = vrot.slane %v36, %v269
    %v287 = vunpack.c.l.b16 %v243
    %v288 = vunpack.c.l.b16 %v244
    %v289 = vunpack.c.l.b16 %v245
    %v290 = vunpack.c.l.b16 %v246
    %v291 = vunpack.c.l.b16 %v247
    %v292 = vunpack.c.l.b16 %v248
    %v293 = vunpack.c.l.b16 %v249
    %v294 = vunpack.c.l.b16 %v250
    %v295 = vunpack.c.l.b16 %v251
    %v296 = vunpack.c.l.b16 %v252
    %v297 = vunpack.c.l.b16 %v253
    %v298 = vunpack.c.l.b16 %v254
    %v299 = vunpack.c.l.b16 %v255
    %v300 = vunpack.c.l.b16 %v256
    %v301 = vunpack.c.l.b16 %v257
    %v302 = vunpack.c.l.b16 %v258
    %v303 = vpack.c.b16 %v288, %v287
    %v304 = vpack.c.b16 %v290, %v289
    %v305 = vpack.c.b16 %v292, %v291
    %v306 = vpack.c.b16 %v294, %v293
    %v307 = vpack.c.b16 %v296, %v295
    %v308 = vpack.c.b16 %v298, %v297
    %v309 = vpack.c.b16 %v300, %v299
    %v310 = vpack.c.b16 %v302, %v301
    %319 = vmatprep.subr.bf16.mxu0 0
    %320 = vmatpush1.bf16.msra.mxu0 %v303
    %321 = vmatprep.subr.bf16.mxu0 0
    %322 = vmatpush1.bf16.msra.mxu0 %v304
    %323 = vmatprep.subr.bf16.mxu0 0
    %324 = vmatpush1.bf16.msra.mxu0 %v305
    %325 = vmatprep.subr.bf16.mxu0 0
    %326 = vmatpush1.bf16.msra.mxu0 %v306
    %327 = vmatprep.subr.bf16.mxu0 0
    %328 = vmatpush1.bf16.msra.mxu0 %v307
    %329 = vmatprep.subr.bf16.mxu0 0
    %330 = vmatpush1.bf16.msra.mxu0 %v308
    %331 = vmatprep.subr.bf16.mxu0 0
    %332 = vmatpush1.bf16.msra.mxu0 %v309
    %333 = vmatprep.subr.bf16.mxu0 0
    %334 = vmatpush1.bf16.msra.mxu0 %v310
    %335 = vmatprep.subr.bf16.mxu0 0
    %336 = vmatpush1.bf16.msra.mxu0 0
    %337 = vmatprep.subr.bf16.mxu0 0
    %338 = vmatpush1.bf16.msra.mxu0 0
    %339 = vmatprep.subr.bf16.mxu0 0
    %340 = vmatpush1.bf16.msra.mxu0 0
    %341 = vmatprep.subr.bf16.mxu0 0
    %342 = vmatpush1.bf16.msra.mxu0 0
    %343 = vmatprep.subr.bf16.mxu0 0
    %344 = vmatpush1.bf16.msra.mxu0 0
    %345 = vmatprep.subr.bf16.mxu0 0
    %346 = vmatpush1.bf16.msra.mxu0 0
    %347 = vmatprep.subr.bf16.mxu0 0
    %348 = vmatpush1.bf16.msra.mxu0 0
    %349 = vmatprep.subr.bf16.mxu0 0
    %350 = vmatpush1.bf16.msra.mxu0 0
    %351 = vmatprep.mubr.bf16.mxu0 0
    %352 = vmatmul.mubr.bf16.gmra.mrb[0].mxu0 %v259
    %v353 = vpop.f32.mrb[0].mxu0
    %v354 = vadd.f32 %v270, %v353
    %v355 = vpop.f32.mrb[0].mxu0
    %v356 = vpop.f32.mrb[0].mxu0
    %v357 = vadd.f32 %v270, %v356
    %v358 = vpop.f32.mrb[0].mxu0
    %359 = vmatprep.mubr.bf16.mxu0 0
    %360 = vmatmul.mubr.bf16.gmra.mrb[0].mxu0 %v260
    %v361 = vpop.f32.mrb[0].mxu0
    %v362 = vadd.f32 %v270, %v361
    %v363 = vpop.f32.mrb[0].mxu0
    %v364 = vpop.f32.mrb[0].mxu0
    %v365 = vadd.f32 %v270, %v364
    %v366 = vpop.f32.mrb[0].mxu0
    %367 = vmatprep.mubr.bf16.mxu0 0
    %368 = vmatmul.mubr.bf16.gmra.mrb[0].mxu0 %v261
    %v369 = vpop.f32.mrb[0].mxu0
    %v370 = vadd.f32 %v270, %v369
    %v371 = vpop.f32.mrb[0].mxu0
    %v372 = vpop.f32.mrb[0].mxu0
    %v373 = vadd.f32 %v270, %v372
    %v374 = vpop.f32.mrb[0].mxu0
    %375 = vmatprep.mubr.bf16.mxu0 0
    %376 = vmatmul.mubr.bf16.gmra.mrb[0].mxu0 %v262
    %v377 = vpop.f32.mrb[0].mxu0
    %v378 = vadd.f32 %v270, %v377
    %v379 = vpop.f32.mrb[0].mxu0
    %v380 = vpop.f32.mrb[0].mxu0
    %v381 = vadd.f32 %v270, %v380
    %v382 = vpop.f32.mrb[0].mxu0
    %383 = vmatprep.mubr.bf16.mxu0 0
    %384 = vmatmul.mubr.bf16.gmra.mrb[0].mxu0 %v263
    %v385 = vpop.f32.mrb[0].mxu0
    %v386 = vadd.f32 %v270, %v385
    %v387 = vpop.f32.mrb[0].mxu0
    %v388 = vpop.f32.mrb[0].mxu0
    %v389 = vadd.f32 %v270, %v388
    %v390 = vpop.f32.mrb[0].mxu0
    %391 = vmatprep.mubr.bf16.mxu0 0
    %392 = vmatmul.mubr.bf16.gmra.mrb[0].mxu0 %v264
    %v393 = vpop.f32.mrb[0].mxu0
    %v394 = vadd.f32 %v270, %v393
    %v395 = vpop.f32.mrb[0].mxu0
    %v396 = vpop.f32.mrb[0].mxu0
    %v397 = vadd.f32 %v270, %v396
    %v398 = vpop.f32.mrb[0].mxu0
    %399 = vmatprep.mubr.bf16.mxu0 0
    %400 = vmatmul.mubr.bf16.gmra.mrb[0].mxu0 %v265
    %v401 = vpop.f32.mrb[0].mxu0
    %v402 = vadd.f32 %v270, %v401
    %v403 = vpop.f32.mrb[0].mxu0
    %v404 = vpop.f32.mrb[0].mxu0
    %v405 = vadd.f32 %v270, %v404
    %v406 = vpop.f32.mrb[0].mxu0
    %407 = vmatprep.mubr.bf16.mxu0 0
    %408 = vmatmul.mubr.bf16.gmra.mrb[0].mxu0 %v266
    %v409 = vpop.f32.mrb[0].mxu0
    %v410 = vadd.f32 %v270, %v409
    %v411 = vpop.f32.mrb[0].mxu0
    %v412 = vpop.f32.mrb[0].mxu0
    %v413 = vadd.f32 %v270, %v412
    %v414 = vpop.f32.mrb[0].mxu0
    %415 = vdwg.mxu0
    %v416 = vmax.f32 %v354, 0.0
    %v417 = vmax.f32 %v357, 0.0
    %v418 = vmax.f32 %v362, 0.0
    %v419 = vmax.f32 %v365, 0.0
    %v420 = vmax.f32 %v370, 0.0
    %v421 = vmax.f32 %v373, 0.0
    %v422 = vmax.f32 %v378, 0.0
    %v423 = vmax.f32 %v381, 0.0
    %v424 = vmax.f32 %v386, 0.0
    %v425 = vmax.f32 %v389, 0.0
    %v426 = vmax.f32 %v394, 0.0
    %v427 = vmax.f32 %v397, 0.0
    %v428 = vmax.f32 %v402, 0.0
    %v429 = vmax.f32 %v405, 0.0
    %v430 = vmax.f32 %v410, 0.0
    %v431 = vmax.f32 %v413, 0.0
    %v432 = vld [vmem:[#allocation2] sm:$0xf]
    %v433 = vld [vmem:[#allocation2 + $0x4] sm:$0xf]
    %v434 = vld [vmem:[#allocation2 + $0x8] sm:$0xf]
    %v435 = vld [vmem:[#allocation2 + $0xc] sm:$0xf]
    %v436 = vld [vmem:[#allocation2 + $0x10] sm:$0xf]
    %v437 = vld [vmem:[#allocation2 + $0x14] sm:$0xf]
    %v438 = vld [vmem:[#allocation2 + $0x18] sm:$0xf]
    %v439 = vld [vmem:[#allocation2 + $0x1c] sm:$0xf]
    %v440 = vld [vmem:[#allocation2 + $0x20] sm:$0xf]
    %v441 = vld [vmem:[#allocation2 + $0x24] sm:$0xf]
    %v442 = vld [vmem:[#allocation2 + $0x28] sm:$0xf]
    %v443 = vld [vmem:[#allocation2 + $0x2c] sm:$0xf]
    %v444 = vld [vmem:[#allocation2 + $0x30] sm:$0xf]
    %v445 = vld [vmem:[#allocation2 + $0x34] sm:$0xf]
    %v446 = vld [vmem:[#allocation2 + $0x38] sm:$0xf]
    %v447 = vld [vmem:[#allocation2 + $0x3c] sm:$0xf]
    %v448 = vpack.c.bf16 %v417, %v416
    %v449 = vpack.c.bf16 %v419, %v418
    %v450 = vpack.c.bf16 %v421, %v420
    %v451 = vpack.c.bf16 %v423, %v422
    %v452 = vpack.c.bf16 %v425, %v424
    %v453 = vpack.c.bf16 %v427, %v426
    %v454 = vpack.c.bf16 %v429, %v428
    %v455 = vpack.c.bf16 %v431, %v430
    %v456 = vlaneseq
    %v457 = vshrl.u32 %v456, 7
    %v458 = vsub.s32 2, %v457
    %v459 = vrot.slane %v36, %v458
    %v476 = vunpack.c.l.b16 %v432
    %v477 = vunpack.c.l.b16 %v433
    %v478 = vunpack.c.l.b16 %v434
    %v479 = vunpack.c.l.b16 %v435
    %v480 = vunpack.c.l.b16 %v436
    %v481 = vunpack.c.l.b16 %v437
    %v482 = vunpack.c.l.b16 %v438
    %v483 = vunpack.c.l.b16 %v439
    %v484 = vunpack.c.l.b16 %v440
    %v485 = vunpack.c.l.b16 %v441
    %v486 = vunpack.c.l.b16 %v442
    %v487 = vunpack.c.l.b16 %v443
    %v488 = vunpack.c.l.b16 %v444
    %v489 = vunpack.c.l.b16 %v445
    %v490 = vunpack.c.l.b16 %v446
    %v491 = vunpack.c.l.b16 %v447
    %v492 = vpack.c.b16 %v477, %v476
    %v493 = vpack.c.b16 %v479, %v478
    %v494 = vpack.c.b16 %v481, %v480
    %v495 = vpack.c.b16 %v483, %v482
    %v496 = vpack.c.b16 %v485, %v484
    %v497 = vpack.c.b16 %v487, %v486
    %v498 = vpack.c.b16 %v489, %v488
    %v499 = vpack.c.b16 %v491, %v490
    %508 = vmatprep.subr.bf16.mxu0 0
    %509 = vmatpush1.bf16.msra.mxu0 %v492
    %510 = vmatprep.subr.bf16.mxu0 0
    %511 = vmatpush1.bf16.msra.mxu0 %v493
    %512 = vmatprep.subr.bf16.mxu0 0
    %513 = vmatpush1.bf16.msra.mxu0 %v494
    %514 = vmatprep.subr.bf16.mxu0 0
    %515 = vmatpush1.bf16.msra.mxu0 %v495
    %516 = vmatprep.subr.bf16.mxu0 0
    %517 = vmatpush1.bf16.msra.mxu0 %v496
    %518 = vmatprep.subr.bf16.mxu0 0
    %519 = vmatpush1.bf16.msra.mxu0 %v497
    %520 = vmatprep.subr.bf16.mxu0 0
    %521 = vmatpush1.bf16.msra.mxu0 %v498
    %522 = vmatprep.subr.bf16.mxu0 0
    %523 = vmatpush1.bf16.msra.mxu0 %v499
    %524 = vmatprep.subr.bf16.mxu0 0
    %525 = vmatpush1.bf16.msra.mxu0 0
    %526 = vmatprep.subr.bf16.mxu0 0
    %527 = vmatpush1.bf16.msra.mxu0 0
    %528 = vmatprep.subr.bf16.mxu0 0
    %529 = vmatpush1.bf16.msra.mxu0 0
    %530 = vmatprep.subr.bf16.mxu0 0
    %531 = vmatpush1.bf16.msra.mxu0 0
    %532 = vmatprep.subr.bf16.mxu0 0
    %533 = vmatpush1.bf16.msra.mxu0 0
    %534 = vmatprep.subr.bf16.mxu0 0
    %535 = vmatpush1.bf16.msra.mxu0 0
    %536 = vmatprep.subr.bf16.mxu0 0
    %537 = vmatpush1.bf16.msra.mxu0 0
    %538 = vmatprep.subr.bf16.mxu0 0
    %539 = vmatpush1.bf16.msra.mxu0 0
    %540 = vmatprep.mubr.bf16.mxu0 0
    %541 = vmatmul.mubr.bf16.gmra.mrb[0].mxu0 %v448
    %v542 = vpop.f32.mrb[0].mxu0
    %v543 = vadd.f32 %v459, %v542
    %v544 = vpop.f32.mrb[0].mxu0
    %v545 = vpop.f32.mrb[0].mxu0
    %v546 = vadd.f32 %v459, %v545
    %v547 = vpop.f32.mrb[0].mxu0
    %548 = vmatprep.mubr.bf16.mxu0 0
    %549 = vmatmul.mubr.bf16.gmra.mrb[0].mxu0 %v449
    %v550 = vpop.f32.mrb[0].mxu0
    %v551 = vadd.f32 %v459, %v550
    %v552 = vpop.f32.mrb[0].mxu0
    %v553 = vpop.f32.mrb[0].mxu0
    %v554 = vadd.f32 %v459, %v553
    %v555 = vpop.f32.mrb[0].mxu0
    %556 = vmatprep.mubr.bf16.mxu0 0
    %557 = vmatmul.mubr.bf16.gmra.mrb[0].mxu0 %v450
    %v558 = vpop.f32.mrb[0].mxu0
    %v559 = vadd.f32 %v459, %v558
    %v560 = vpop.f32.mrb[0].mxu0
    %v561 = vpop.f32.mrb[0].mxu0
    %v562 = vadd.f32 %v459, %v561
    %v563 = vpop.f32.mrb[0].mxu0
    %564 = vmatprep.mubr.bf16.mxu0 0
    %565 = vmatmul.mubr.bf16.gmra.mrb[0].mxu0 %v451
    %v566 = vpop.f32.mrb[0].mxu0
    %v567 = vadd.f32 %v459, %v566
    %v568 = vpop.f32.mrb[0].mxu0
    %v569 = vpop.f32.mrb[0].mxu0
    %v570 = vadd.f32 %v459, %v569
    %v571 = vpop.f32.mrb[0].mxu0
    %572 = vmatprep.mubr.bf16.mxu0 0
    %573 = vmatmul.mubr.bf16.gmra.mrb[0].mxu0 %v452
    %v574 = vpop.f32.mrb[0].mxu0
    %v575 = vadd.f32 %v459, %v574
    %v576 = vpop.f32.mrb[0].mxu0
    %v577 = vpop.f32.mrb[0].mxu0
    %v578 = vadd.f32 %v459, %v577
    %v579 = vpop.f32.mrb[0].mxu0
    %580 = vmatprep.mubr.bf16.mxu0 0
    %581 = vmatmul.mubr.bf16.gmra.mrb[0].mxu0 %v453
    %v582 = vpop.f32.mrb[0].mxu0
    %v583 = vadd.f32 %v459, %v582
    %v584 = vpop.f32.mrb[0].mxu0
    %v585 = vpop.f32.mrb[0].mxu0
    %v586 = vadd.f32 %v459, %v585
    %v587 = vpop.f32.mrb[0].mxu0
    %588 = vmatprep.mubr.bf16.mxu0 0
    %589 = vmatmul.mubr.bf16.gmra.mrb[0].mxu0 %v454
    %v590 = vpop.f32.mrb[0].mxu0
    %v591 = vadd.f32 %v459, %v590
    %v592 = vpop.f32.mrb[0].mxu0
    %v593 = vpop.f32.mrb[0].mxu0
    %v594 = vadd.f32 %v459, %v593
    %v595 = vpop.f32.mrb[0].mxu0
    %596 = vmatprep.mubr.bf16.mxu0 0
    %597 = vmatmul.mubr.bf16.gmra.mrb[0].mxu0 %v455
    %v598 = vpop.f32.mrb[0].mxu0
    %v599 = vadd.f32 %v459, %v598
    %v600 = vpop.f32.mrb[0].mxu0
    %v601 = vpop.f32.mrb[0].mxu0
    %v602 = vadd.f32 %v459, %v601
    %v603 = vpop.f32.mrb[0].mxu0
    %604 = vdwg.mxu0
    %v605 = vmax.f32 %v543, 0.0
    %v606 = vmax.f32 %v546, 0.0
    %v607 = vmax.f32 %v551, 0.0
    %v608 = vmax.f32 %v554, 0.0
    %v609 = vmax.f32 %v559, 0.0
    %v610 = vmax.f32 %v562, 0.0
    %v611 = vmax.f32 %v567, 0.0
    %v612 = vmax.f32 %v570, 0.0
    %v613 = vmax.f32 %v575, 0.0
    %v614 = vmax.f32 %v578, 0.0
    %v615 = vmax.f32 %v583, 0.0
    %v616 = vmax.f32 %v586, 0.0
    %v617 = vmax.f32 %v591, 0.0
    %v618 = vmax.f32 %v594, 0.0
    %v619 = vmax.f32 %v599, 0.0
    %v620 = vmax.f32 %v602, 0.0
    %621 = vxpose.xlu0.b32.start [1/16] %v605, 128
    %622 = vxpose.xlu0.b32.cont [2/16] %v606, 128
    %623 = vxpose.xlu0.b32.cont [3/16] %v607, 128
    %624 = vxpose.xlu0.b32.cont [4/16] %v608, 128
    %625 = vxpose.xlu0.b32.cont [5/16] %v609, 128
    %626 = vxpose.xlu0.b32.cont [6/16] %v610, 128
    %627 = vxpose.xlu0.b32.cont [7/16] %v611, 128
    %628 = vxpose.xlu0.b32.cont [8/16] %v612, 128
    %629 = vxpose.xlu0.b32.cont [9/16] %v613, 128
    %630 = vxpose.xlu0.b32.cont [10/16] %v614, 128
    %631 = vxpose.xlu0.b32.cont [11/16] %v615, 128
    %632 = vxpose.xlu0.b32.cont [12/16] %v616, 128
    %633 = vxpose.xlu0.b32.cont [13/16] %v617, 128
    %634 = vxpose.xlu0.b32.cont [14/16] %v618, 128
    %635 = vxpose.xlu0.b32.cont [15/16] %v619, 128
    %636 = vxpose.xlu0.b32.end [16/16] %v620, 128
    %v637 = vpop.trf.xlu0
    %v638 = vpop.trf.xlu0
    %v639 = vpop.trf.xlu0
    %v640 = vpop.trf.xlu0
    %v641 = vpop.trf.xlu0
    %v642 = vpop.trf.xlu0
    %v643 = vpop.trf.xlu0
    %v644 = vpop.trf.xlu0
    %v645 = vpop.trf.xlu0
    %v646 = vpop.trf.xlu0
    %v647 = vpop.trf.xlu0
    %v648 = vpop.trf.xlu0
    %v649 = vpop.trf.xlu0
    %v650 = vpop.trf.xlu0
    %v651 = vpop.trf.xlu0
    %v652 = vpop.trf.xlu0
    %653 = vst [vmem:[#allocation5] sm:$0x1] %v637
    // Predicated region
    $region26: #{tpu_custom_call.1} parent=1 // pred_check
      _
    $region27: #{tpu_custom_call.1} parent=1 // pred_check_branch
      %655 = sbr.rel (0) target = $region29
    $region28: #{tpu_custom_call.1} parent=1 // pred_region
      %s657 = ssub.s32 16, 16
      %658 = vsyncadd [#allocation4], %s657
      %s660 = sshll.u32 [#allocation5], 4
      %s661 = int_to_ptr.vmem [resolvable:$true] %s660
      %663 = dma.vmem_to_hbm [thread:$0]  %s661, 16, %s5, [#allocation4]
    $region29: #{tpu_custom_call.1} parent=1 // pred_fallthru
      _
    // Predicated region
    $region30: #{tpu_custom_call.1} parent=1 // pred_check
      _
    $region31: #{tpu_custom_call.1} parent=1 // pred_check_branch
      %665 = sbr.rel (0) target = $region33
    $region32: #{tpu_custom_call.1} parent=1 // pred_region
      %666 = dma.done [#allocation4], 16
    $region33: #{tpu_custom_call.1} parent=1 // pred_fallthru
      _
    %667 = vsyncpa [#allocation3], 1
    %668 = vsyncpa [#allocation4], 1

</llo_original>
